<compile_context>
chip_gen: v7x
topology: tpu7x:2x2x1
jax: 0.10.0
libtpu: 0.0.40
codegen_flags: <defaults>
</compile_context>

<pallas_src>
from functools import partial

import jax
import jax.numpy as jnp
from jax.experimental import pallas as pl
from jax.experimental.pallas import tpu as pltpu

NEG_SLOPE = 0.01  # torch.nn.LeakyReLU default negative_slope


def _leaky_relu(x):
    return jnp.where(x >= 0, x, NEG_SLOPE * x)


# ---------------------------------------------------------------------------
# Fused kernel: conv1 + LReLU + conv2 + LReLU + residual (+ optional LReLU)
# ---------------------------------------------------------------------------
def _fused_block_kernel(*refs, K, dil, T, Bblk, final, has_downsample):
    if has_downsample:
        (x_ref, w1_ref, b1_ref, w2_ref, b2_ref, wd_ref, bd_ref, o_ref) = refs
    else:
        (x_ref, w1_ref, b1_ref, w2_ref, b2_ref, o_ref) = refs

    # ---- fold batch into the lane (time) axis: x_flat is (Cin, Bblk*T) ----
    x = x_ref[...].astype(jnp.float32)                      # (Bblk, Cin, T)
    if Bblk > 1:
        x_flat = jnp.concatenate([x[b] for b in range(Bblk)], axis=1)
    else:
        x_flat = x[0]

    def shift_right(a, shift):
        # Shift every per-batch time segment right by `shift`, zero-filling
        # on the left (== causal left padding + chomp).  a: (C, Bblk*T).
        if shift == 0:
            return a
        C = a.shape[0]
        segs = []
        for b in range(Bblk):
            if shift >= T:
                segs.append(jnp.zeros((C, T), jnp.float32))
            else:
                segs.append(jnp.concatenate(
                    [jnp.zeros((C, shift), jnp.float32),
                     a[:, b * T:b * T + (T - shift)]], axis=1))
        return segs[0] if Bblk == 1 else jnp.concatenate(segs, axis=1)

    def causal_conv(a, w_flat, bias):
        # a: (C, Bblk*T); w_flat: (Cout, K*C) with columns grouped by tap k;
        # bias: (Cout, 1).  Build the im2col stack once, then ONE MXU matmul.
        cols = [shift_right(a, (K - 1 - k) * dil) for k in range(K)]
        a_col = cols[0] if K == 1 else jnp.concatenate(cols, axis=0)
        return jnp.dot(w_flat, a_col,
                       preferred_element_type=jnp.float32) + bias

    h1 = _leaky_relu(causal_conv(x_flat, w1_ref[...], b1_ref[...]))
    h2 = _leaky_relu(causal_conv(h1, w2_ref[...], b2_ref[...]))

    if has_downsample:
        res = jnp.dot(wd_ref[...], x_flat,
                      preferred_element_type=jnp.float32) + bd_ref[...]
    else:
        res = x_flat                       # in_channels == out_channels
    out = h2 + res
    if final:
        out = _leaky_relu(out)

    for b in range(Bblk):                  # unfold batch back out of lanes
        o_ref[b] = out[:, b * T:(b + 1) * T].astype(o_ref.dtype)


# ---------------------------------------------------------------------------
# Wrapper
# ---------------------------------------------------------------------------
def _pick_batch_block(B, Cin, Cout, T, K, budget_bytes=4 << 20):
    # rough f32 working-set estimate per batch inside the fused kernel
    per_batch = 4 * T * ((K + 2) * (Cin + Cout) + 2 * Cout)
    cap = max(1, budget_bytes // max(per_batch, 1))
    best = 1
    for d in range(1, B + 1):
        if B % d == 0 and d <= cap:
            best = d
    return best


def causal_conv_block_forward(x, w1, b1, w2, b2, wd, bd, *,
                              kernel_size, dilation, final=False,
                              batch_block=None):
    """x: (B, Cin, T) float32.  Returns (B, Cout, T) float32."""
    B, Cin, T = x.shape
    K, dil = kernel_size, dilation
    Cout = w1.shape[0]
    has_downsample = wd is not None

    if batch_block is None:
        batch_block = _pick_batch_block(B, Cin, Cout, T, K)
    assert B % batch_block == 0, "batch_block must divide B"
    Bblk = batch_block

    # Flatten conv weights so each conv is one matmul:
    #   w_flat[:, k*C:(k+1)*C] == w[:, :, k]
    w1f = jnp.transpose(w1, (0, 2, 1)).reshape(Cout, K * Cin)
    w2f = jnp.transpose(w2, (0, 2, 1)).reshape(Cout, K * Cout)

    args = [x, w1f, b1.reshape(Cout, 1), w2f, b2.reshape(Cout, 1)]
    in_specs = [
        pl.BlockSpec((Bblk, Cin, T), lambda i: (i, 0, 0)),
        pl.BlockSpec((Cout, K * Cin), lambda i: (0, 0)),
        pl.BlockSpec((Cout, 1), lambda i: (0, 0)),
        pl.BlockSpec((Cout, K * Cout), lambda i: (0, 0)),
        pl.BlockSpec((Cout, 1), lambda i: (0, 0)),
    ]
    if has_downsample:
        args += [wd, bd.reshape(Cout, 1)]
        in_specs += [
            pl.BlockSpec((Cout, Cin), lambda i: (0, 0)),
            pl.BlockSpec((Cout, 1), lambda i: (0, 0)),
        ]

    kernel = partial(_fused_block_kernel, K=K, dil=dil, T=T, Bblk=Bblk,
                     final=final, has_downsample=has_downsample)

    return pl.pallas_call(
        kernel,
        out_shape=jax.ShapeDtypeStruct((B, Cout, T), jnp.float32),
        grid=(B // Bblk,),
        in_specs=in_specs,
        out_specs=pl.BlockSpec((Bblk, Cout, T), lambda i: (i, 0, 0)),
        compiler_params=pltpu.CompilerParams(
            dimension_semantics=("parallel",)),
    )(*args)


# ---------------------------------------------------------------------------
# Parameter setup (weight_norm) + pure-JAX reference
# ---------------------------------------------------------------------------
def weight_norm(v, g):
    # torch.nn.utils.weight_norm default: norm over all dims except dim 0
    norm = jnp.sqrt(jnp.sum(v * v, axis=(1, 2), keepdims=True))
    return g.reshape(-1, 1, 1) * v / norm


def ref_forward(x, w1, b1, w2, b2, wd, bd, K, dil, final=False):
    P = (K - 1) * dil
    T = x.shape[2]

    def causal_conv(inp, w, b):
        xp = jnp.pad(inp, ((0, 0), (0, 0), (P, 0)))
        out = b[None, :, None]
        for k in range(K):
            out = out + jnp.einsum('oi,bit->bot', w[:, :, k],
                                   xp[:, :, k * dil:k * dil + T])
        return out

    h1 = _leaky_relu(causal_conv(x, w1, b1))
    h2 = _leaky_relu(causal_conv(h1, w2, b2))
    if wd is None:
        res = x
    else:
        res = jnp.einsum('oi,bit->bot', wd, x) + bd[None, :, None]
    out = h2 + res
    return _leaky_relu(out) if final else out


# ---------------------------------------------------------------------------
# Self-test
# ---------------------------------------------------------------------------
def _make_params(key, Cin, Cout, K, with_downsample):
    ks = jax.random.split(key, 9)
    v1 = jax.random.normal(ks[0], (Cout, Cin, K), dtype=jnp.float32) * 0.3
    g1 = jax.random.uniform(ks[1], (Cout,), dtype=jnp.float32) + 0.5
    b1 = jax.random.normal(ks[2], (Cout,), dtype=jnp.float32) * 0.1
    v2 = jax.random.normal(ks[3], (Cout, Cout, K), dtype=jnp.float32) * 0.3
    g2 = jax.random.uniform(ks[4], (Cout,), dtype=jnp.float32) + 0.5
    b2 = jax.random.normal(ks[5], (Cout,), dtype=jnp.float32) * 0.1
    w1 = weight_norm(v1, g1)
    w2 = weight_norm(v2, g2)
    if with_downsample:
        wd = jax.random.normal(ks[6], (Cout, Cin), dtype=jnp.float32) * 0.3
        bd = jax.random.normal(ks[7], (Cout,), dtype=jnp.float32) * 0.1
    else:
        wd, bd = None, None
    return w1, b1, w2, b2, wd, bd


if __name__ == "__main__":
    key = jax.random.PRNGKey(0)
    k_x1, k_p1, k_x2, k_p2 = jax.random.split(key, 4)

    # Case 1: in_channels != out_channels  (1x1-conv residual), final=False
    B, Cin, Cout, T, K, dil = 2, 4, 8, 16, 3, 2
    x1 = jax.random.normal(k_x1, (B, Cin, T), dtype=jnp.float32)
    w1, b1, w2, b2, wd, bd = _make_params(k_p1, Cin, Cout, K, True)
    out1 = causal_conv_block_forward(x1, w1, b1, w2, b2, wd, bd,
                                     kernel_size=K, dilation=dil, final=False)
    out1 = jax.block_until_ready(out1)
    ref1 = ref_forward(x1, w1, b1, w2, b2, wd, bd, K, dil, final=False)
    assert out1.shape == (B, Cout, T)
    assert jnp.allclose(out1, ref1, atol=1e-4, rtol=1e-4), "mismatch (case 1)"

    # Case 2: in_channels == out_channels (identity residual), final=True
    Cin2 = Cout2 = 8
    x2 = jax.random.normal(k_x2, (B, Cin2, T), dtype=jnp.float32)
    w1b, b1b, w2b, b2b, _, _ = _make_params(k_p2, Cin2, Cout2, K, False)
    out2 = causal_conv_block_forward(x2, w1b, b1b, w2b, b2b, None, None,
                                     kernel_size=K, dilation=dil, final=True)
    out2 = jax.block_until_ready(out2)
    ref2 = ref_forward(x2, w1b, b1b, w2b, b2b, None, None, K, dil, final=True)
    assert out2.shape == (B, Cout2, T)
    assert jnp.allclose(out2, ref2, atol=1e-4, rtol=1e-4), "mismatch (case 2)"

    print("KERNEL_OK")
</pallas_src>

<mosaic_0001>
module attributes {stable_mosaic.version = 11 : i64} {
  func.func @_fused_block_kernel(%arg0: i32, %arg1: memref<2x4x16xf32, #tpu.memory_space<vmem>>, %arg2: memref<8x12xf32, #tpu.memory_space<vmem>>, %arg3: memref<8x1xf32, #tpu.memory_space<vmem>>, %arg4: memref<8x24xf32, #tpu.memory_space<vmem>>, %arg5: memref<8x1xf32, #tpu.memory_space<vmem>>, %arg6: memref<8x4xf32, #tpu.memory_space<vmem>>, %arg7: memref<8x1xf32, #tpu.memory_space<vmem>>, %arg8: memref<2x8x16xf32, #tpu.memory_space<vmem>>) attributes {dimension_semantics = [#tpu.dimension_semantics<parallel>], iteration_bounds = array<i64: 1>, scalar_prefetch = 0 : i64, scratch_operands = 0 : i64, tpu.core_type = #tpu.core_type<tc>, window_params = [{transform_indices = @transform_0, window_bounds = array<i64: 2, 4, 16>}, {pipeline_mode = #tpu.pipeline_mode<synchronous>, transform_indices = @transform_1, window_bounds = array<i64: 8, 12>}, {pipeline_mode = #tpu.pipeline_mode<synchronous>, transform_indices = @transform_2, window_bounds = array<i64: 8, 1>}, {pipeline_mode = #tpu.pipeline_mode<synchronous>, transform_indices = @transform_3, window_bounds = array<i64: 8, 24>}, {pipeline_mode = #tpu.pipeline_mode<synchronous>, transform_indices = @transform_4, window_bounds = array<i64: 8, 1>}, {pipeline_mode = #tpu.pipeline_mode<synchronous>, transform_indices = @transform_5, window_bounds = array<i64: 8, 4>}, {pipeline_mode = #tpu.pipeline_mode<synchronous>, transform_indices = @transform_6, window_bounds = array<i64: 8, 1>}, {transform_indices = @transform_7, window_bounds = array<i64: 2, 8, 16>}]} {
    %c0 = arith.constant 0 : index
    %c0_0 = arith.constant 0 : index
    %c0_1 = arith.constant 0 : index
    %0 = vector.load %arg1[%c0, %c0_0, %c0_1] : memref<2x4x16xf32, #tpu.memory_space<vmem>>, vector<2x4x16xf32>
    %1 = vector.extract_strided_slice %0 {offsets = [0, 0, 0], sizes = [1, 4, 16], strides = [1, 1, 1]} : vector<2x4x16xf32> to vector<1x4x16xf32>
    %2 = vector.shape_cast %1 : vector<1x4x16xf32> to vector<4x16xf32>
    %3 = vector.extract_strided_slice %0 {offsets = [1, 0, 0], sizes = [1, 4, 16], strides = [1, 1, 1]} : vector<2x4x16xf32> to vector<1x4x16xf32>
    %4 = vector.shape_cast %3 : vector<1x4x16xf32> to vector<4x16xf32>
    %5 = tpu.concatenate %2, %4 in 1 : vector<4x16xf32>, vector<4x16xf32> -> vector<4x32xf32>
    %c0_2 = arith.constant 0 : index
    %c0_3 = arith.constant 0 : index
    %6 = vector.load %arg2[%c0_2, %c0_3] : memref<8x12xf32, #tpu.memory_space<vmem>>, vector<8x12xf32>
    %c0_4 = arith.constant 0 : index
    %c0_5 = arith.constant 0 : index
    %7 = vector.load %arg3[%c0_4, %c0_5] : memref<8x1xf32, #tpu.memory_space<vmem>>, vector<8x1xf32>
    %cst = arith.constant 0.000000e+00 : f32
    %8 = vector.broadcast %cst : f32 to vector<4x4xf32>
    %9 = vector.extract_strided_slice %5 {offsets = [0, 0], sizes = [4, 12], strides = [1, 1]} : vector<4x32xf32> to vector<4x12xf32>
    %10 = tpu.concatenate %8, %9 in 1 : vector<4x4xf32>, vector<4x12xf32> -> vector<4x16xf32>
    %cst_6 = arith.constant 0.000000e+00 : f32
    %11 = vector.broadcast %cst_6 : f32 to vector<4x4xf32>
    %12 = vector.extract_strided_slice %5 {offsets = [0, 16], sizes = [4, 12], strides = [1, 1]} : vector<4x32xf32> to vector<4x12xf32>
    %13 = tpu.concatenate %11, %12 in 1 : vector<4x4xf32>, vector<4x12xf32> -> vector<4x16xf32>
    %14 = tpu.concatenate %10, %13 in 1 : vector<4x16xf32>, vector<4x16xf32> -> vector<4x32xf32>
    %cst_7 = arith.constant 0.000000e+00 : f32
    %15 = vector.broadcast %cst_7 : f32 to vector<4x2xf32>
    %16 = vector.extract_strided_slice %5 {offsets = [0, 0], sizes = [4, 14], strides = [1, 1]} : vector<4x32xf32> to vector<4x14xf32>
    %17 = tpu.concatenate %15, %16 in 1 : vector<4x2xf32>, vector<4x14xf32> -> vector<4x16xf32>
    %cst_8 = arith.constant 0.000000e+00 : f32
    %18 = vector.broadcast %cst_8 : f32 to vector<4x2xf32>
    %19 = vector.extract_strided_slice %5 {offsets = [0, 16], sizes = [4, 14], strides = [1, 1]} : vector<4x32xf32> to vector<4x14xf32>
    %20 = tpu.concatenate %18, %19 in 1 : vector<4x2xf32>, vector<4x14xf32> -> vector<4x16xf32>
    %21 = tpu.concatenate %17, %20 in 1 : vector<4x16xf32>, vector<4x16xf32> -> vector<4x32xf32>
    %22 = tpu.concatenate %14, %21, %5 in 0 : vector<4x32xf32>, vector<4x32xf32>, vector<4x32xf32> -> vector<12x32xf32>
    %cst_9 = arith.constant dense<0.000000e+00> : vector<8x32xf32>
    %23 = tpu.matmul %6, %22, %cst_9 {dimension_numbers = #tpu.dot_dimension_numbers<[1], [0], [0], [1], [0, 0, 1, 1], [], []>} : vector<8x12xf32>, vector<12x32xf32>, vector<8x32xf32> -> vector<8x32xf32>
    %24 = vector.broadcast %7 : vector<8x1xf32> to vector<8x32xf32>
    %25 = arith.addf %23, %24 : vector<8x32xf32>
    %cst_10 = arith.constant 0.000000e+00 : f32
    %26 = vector.broadcast %cst_10 : f32 to vector<8x32xf32>
    %27 = arith.cmpf oge, %25, %26 : vector<8x32xf32>
    %cst_11 = arith.constant 0.00999999977 : f32
    %28 = vector.broadcast %cst_11 : f32 to vector<8x32xf32>
    %29 = arith.mulf %28, %25 : vector<8x32xf32>
    %30 = arith.select %27, %25, %29 : vector<8x32xi1>, vector<8x32xf32>
    %c0_12 = arith.constant 0 : index
    %c0_13 = arith.constant 0 : index
    %31 = vector.load %arg4[%c0_12, %c0_13] : memref<8x24xf32, #tpu.memory_space<vmem>>, vector<8x24xf32>
    %c0_14 = arith.constant 0 : index
    %c0_15 = arith.constant 0 : index
    %32 = vector.load %arg5[%c0_14, %c0_15] : memref<8x1xf32, #tpu.memory_space<vmem>>, vector<8x1xf32>
    %cst_16 = arith.constant 0.000000e+00 : f32
    %33 = vector.broadcast %cst_16 : f32 to vector<8x4xf32>
    %34 = vector.extract_strided_slice %30 {offsets = [0, 0], sizes = [8, 12], strides = [1, 1]} : vector<8x32xf32> to vector<8x12xf32>
    %35 = tpu.concatenate %33, %34 in 1 : vector<8x4xf32>, vector<8x12xf32> -> vector<8x16xf32>
    %cst_17 = arith.constant 0.000000e+00 : f32
    %36 = vector.broadcast %cst_17 : f32 to vector<8x4xf32>
    %37 = vector.extract_strided_slice %30 {offsets = [0, 16], sizes = [8, 12], strides = [1, 1]} : vector<8x32xf32> to vector<8x12xf32>
    %38 = tpu.concatenate %36, %37 in 1 : vector<8x4xf32>, vector<8x12xf32> -> vector<8x16xf32>
    %39 = tpu.concatenate %35, %38 in 1 : vector<8x16xf32>, vector<8x16xf32> -> vector<8x32xf32>
    %cst_18 = arith.constant 0.000000e+00 : f32
    %40 = vector.broadcast %cst_18 : f32 to vector<8x2xf32>
    %41 = vector.extract_strided_slice %30 {offsets = [0, 0], sizes = [8, 14], strides = [1, 1]} : vector<8x32xf32> to vector<8x14xf32>
    %42 = tpu.concatenate %40, %41 in 1 : vector<8x2xf32>, vector<8x14xf32> -> vector<8x16xf32>
    %cst_19 = arith.constant 0.000000e+00 : f32
    %43 = vector.broadcast %cst_19 : f32 to vector<8x2xf32>
    %44 = vector.extract_strided_slice %30 {offsets = [0, 16], sizes = [8, 14], strides = [1, 1]} : vector<8x32xf32> to vector<8x14xf32>
    %45 = tpu.concatenate %43, %44 in 1 : vector<8x2xf32>, vector<8x14xf32> -> vector<8x16xf32>
    %46 = tpu.concatenate %42, %45 in 1 : vector<8x16xf32>, vector<8x16xf32> -> vector<8x32xf32>
    %47 = tpu.concatenate %39, %46, %30 in 0 : vector<8x32xf32>, vector<8x32xf32>, vector<8x32xf32> -> vector<24x32xf32>
    %cst_20 = arith.constant dense<0.000000e+00> : vector<8x32xf32>
    %48 = tpu.matmul %31, %47, %cst_20 {dimension_numbers = #tpu.dot_dimension_numbers<[1], [0], [0], [1], [0, 0, 1, 1], [], []>} : vector<8x24xf32>, vector<24x32xf32>, vector<8x32xf32> -> vector<8x32xf32>
    %49 = vector.broadcast %32 : vector<8x1xf32> to vector<8x32xf32>
    %50 = arith.addf %48, %49 : vector<8x32xf32>
    %cst_21 = arith.constant 0.000000e+00 : f32
    %51 = vector.broadcast %cst_21 : f32 to vector<8x32xf32>
    %52 = arith.cmpf oge, %50, %51 : vector<8x32xf32>
    %cst_22 = arith.constant 0.00999999977 : f32
    %53 = vector.broadcast %cst_22 : f32 to vector<8x32xf32>
    %54 = arith.mulf %53, %50 : vector<8x32xf32>
    %55 = arith.select %52, %50, %54 : vector<8x32xi1>, vector<8x32xf32>
    %c0_23 = arith.constant 0 : index
    %c0_24 = arith.constant 0 : index
    %56 = vector.load %arg6[%c0_23, %c0_24] : memref<8x4xf32, #tpu.memory_space<vmem>>, vector<8x4xf32>
    %cst_25 = arith.constant dense<0.000000e+00> : vector<8x32xf32>
    %57 = tpu.matmul %56, %5, %cst_25 {dimension_numbers = #tpu.dot_dimension_numbers<[1], [0], [0], [1], [0, 0, 1, 1], [], []>} : vector<8x4xf32>, vector<4x32xf32>, vector<8x32xf32> -> vector<8x32xf32>
    %c0_26 = arith.constant 0 : index
    %c0_27 = arith.constant 0 : index
    %58 = vector.load %arg7[%c0_26, %c0_27] : memref<8x1xf32, #tpu.memory_space<vmem>>, vector<8x1xf32>
    %59 = vector.broadcast %58 : vector<8x1xf32> to vector<8x32xf32>
    %60 = arith.addf %57, %59 : vector<8x32xf32>
    %61 = arith.addf %55, %60 : vector<8x32xf32>
    %62 = vector.extract_strided_slice %61 {offsets = [0, 0], sizes = [8, 16], strides = [1, 1]} : vector<8x32xf32> to vector<8x16xf32>
    %c0_28 = arith.constant 0 : index
    %c0_29 = arith.constant 0 : index
    %c0_30 = arith.constant 0 : index
    %63 = vector.load %arg8[%c0_28, %c0_29, %c0_30] : memref<2x8x16xf32, #tpu.memory_space<vmem>>, vector<1x8x16xf32>
    %64 = vector.shape_cast %63 : vector<1x8x16xf32> to vector<8x16xf32>
    %65 = vector.shape_cast %62 : vector<8x16xf32> to vector<1x8x16xf32>
    tpu.vector_store %arg8[%c0_28, %c0_29, %c0_30], %65 {strides = array<i32>} : memref<2x8x16xf32, #tpu.memory_space<vmem>>, vector<1x8x16xf32>,
    %66 = vector.extract_strided_slice %61 {offsets = [0, 16], sizes = [8, 16], strides = [1, 1]} : vector<8x32xf32> to vector<8x16xf32>
    %c1 = arith.constant 1 : index
    %c0_31 = arith.constant 0 : index
    %c0_32 = arith.constant 0 : index
    %67 = vector.load %arg8[%c1, %c0_31, %c0_32] : memref<2x8x16xf32, #tpu.memory_space<vmem>>, vector<1x8x16xf32>
    %68 = vector.shape_cast %67 : vector<1x8x16xf32> to vector<8x16xf32>
    %69 = vector.shape_cast %66 : vector<8x16xf32> to vector<1x8x16xf32>
    tpu.vector_store %arg8[%c1, %c0_31, %c0_32], %69 {strides = array<i32>} : memref<2x8x16xf32, #tpu.memory_space<vmem>>, vector<1x8x16xf32>,
    return
  }
  func.func @transform_0(%arg0: i32) -> (i32, i32, i32) {
    %c0_i32 = arith.constant 0 : i32
    %c0_i32_0 = arith.constant 0 : i32
    %c0_i32_1 = arith.constant 0 : i32
    return %arg0, %c0_i32, %c0_i32_0 : i32, i32, i32
  }
  func.func @transform_1(%arg0: i32) -> (i32, i32) {
    %c0_i32 = arith.constant 0 : i32
    %c0_i32_0 = arith.constant 0 : i32
    %c0_i32_1 = arith.constant 0 : i32
    return %c0_i32, %c0_i32_0 : i32, i32
  }
  func.func @transform_2(%arg0: i32) -> (i32, i32) {
    %c0_i32 = arith.constant 0 : i32
    %c0_i32_0 = arith.constant 0 : i32
    %c0_i32_1 = arith.constant 0 : i32
    return %c0_i32, %c0_i32_0 : i32, i32
  }
  func.func @transform_3(%arg0: i32) -> (i32, i32) {
    %c0_i32 = arith.constant 0 : i32
    %c0_i32_0 = arith.constant 0 : i32
    %c0_i32_1 = arith.constant 0 : i32
    return %c0_i32, %c0_i32_0 : i32, i32
  }
  func.func @transform_4(%arg0: i32) -> (i32, i32) {
    %c0_i32 = arith.constant 0 : i32
    %c0_i32_0 = arith.constant 0 : i32
    %c0_i32_1 = arith.constant 0 : i32
    return %c0_i32, %c0_i32_0 : i32, i32
  }
  func.func @transform_5(%arg0: i32) -> (i32, i32) {
    %c0_i32 = arith.constant 0 : i32
    %c0_i32_0 = arith.constant 0 : i32
    %c0_i32_1 = arith.constant 0 : i32
    return %c0_i32, %c0_i32_0 : i32, i32
  }
  func.func @transform_6(%arg0: i32) -> (i32, i32) {
    %c0_i32 = arith.constant 0 : i32
    %c0_i32_0 = arith.constant 0 : i32
    %c0_i32_1 = arith.constant 0 : i32
    return %c0_i32, %c0_i32_0 : i32, i32
  }
  func.func @transform_7(%arg0: i32) -> (i32, i32, i32) {
    %c0_i32 = arith.constant 0 : i32
    %c0_i32_0 = arith.constant 0 : i32
    %c0_i32_1 = arith.constant 0 : i32
    return %arg0, %c0_i32, %c0_i32_0 : i32, i32, i32
  }
}

</mosaic_0001>

<llo_original>
// kernel: tpu_custom_call.1
$region0: #{tpu_custom_call.1}
  #allocation0 [shape = 'u32[]', space=smem, size = 0x4, offset = 0x4, fixed_abs, tag = 'smem constant byte address 0x4 - core index']
  #allocation1 [shape = 'u32[144,128]{1,0:T(1,128)}', space=vmem, size = 0x12000, scoped, tag = 'internal scratch']
  %s0 = inlined_call_operand.vmem [shape: f32[2,4,16], index: 0, kind: input, shape index: {}]
  %s1 = inlined_call_operand.vmem [shape: f32[8,12], index: 1, kind: input, shape index: {}]
  %s2 = inlined_call_operand.vmem [shape: f32[8,1], index: 2, kind: input, shape index: {}]
  %s3 = inlined_call_operand.vmem [shape: f32[8,24], index: 3, kind: input, shape index: {}]
  %s4 = inlined_call_operand.vmem [shape: f32[8,1], index: 4, kind: input, shape index: {}]
  %s5 = inlined_call_operand.vmem [shape: f32[8,4], index: 5, kind: input, shape index: {}]
  %s6 = inlined_call_operand.vmem [shape: f32[8,1], index: 6, kind: input, shape index: {}]
  %s7 = inlined_call_operand.hbm [shape: f32[2,8,16], index: 7, kind: output, shape index: {}]
  %s8 = sld [smem:[#allocation0]]
  $region38: #{tpu_custom_call.1} parent=0
    _
  %s10 = ssub.s32 1, %s8
  %s11 = scalar_select 0, %s10, %s8
  $region1: #{tpu_custom_call.1} parent=0
    #allocation2 [shape = 'u8[8192]{0}', space=vmem, size = 0x2000, scoped, tag = 'output window, operand 0, single buffered']
    #allocation3 [shape = 's32[1]{0}', space=sflag, size = 0x4, scoped, tag = 'scoped memory for tpu_custom_call.1']
    %12 = vsyncpa [#allocation3], 0
    // Predicated region
    $region2: #{tpu_custom_call.1} parent=1 // pred_check
      _
    $region3: #{tpu_custom_call.1} parent=1 // pred_check_branch
      %14 = sbr.rel (0) target = $region5
    $region4: #{tpu_custom_call.1} parent=1 // pred_region
      _
    $region5: #{tpu_custom_call.1} parent=1 // pred_fallthru
      _
    // Predicated region
    $region6: #{tpu_custom_call.1} parent=1 // pred_check
      _
    $region7: #{tpu_custom_call.1} parent=1 // pred_check_branch
      %16 = sbr.rel (0) target = $region9
    $region8: #{tpu_custom_call.1} parent=1 // pred_region
      _
    $region9: #{tpu_custom_call.1} parent=1 // pred_fallthru
      _
    // Predicated region
    $region10: #{tpu_custom_call.1} parent=1 // pred_check
      _
    $region11: #{tpu_custom_call.1} parent=1 // pred_check_branch
      %18 = sbr.rel (0) target = $region13
    $region12: #{tpu_custom_call.1} parent=1 // pred_region
      _
    $region13: #{tpu_custom_call.1} parent=1 // pred_fallthru
      _
    // Predicated region
    $region14: #{tpu_custom_call.1} parent=1 // pred_check
      _
    $region15: #{tpu_custom_call.1} parent=1 // pred_check_branch
      %20 = sbr.rel (0) target = $region17
    $region16: #{tpu_custom_call.1} parent=1 // pred_region
      _
    $region17: #{tpu_custom_call.1} parent=1 // pred_fallthru
      _
    // Predicated region
    $region18: #{tpu_custom_call.1} parent=1 // pred_check
      _
    $region19: #{tpu_custom_call.1} parent=1 // pred_check_branch
      %22 = sbr.rel (0) target = $region21
    $region20: #{tpu_custom_call.1} parent=1 // pred_region
      _
    $region21: #{tpu_custom_call.1} parent=1 // pred_fallthru
      _
    // Predicated region
    $region22: #{tpu_custom_call.1} parent=1 // pred_check
      _
    $region23: #{tpu_custom_call.1} parent=1 // pred_check_branch
      %24 = sbr.rel (0) target = $region25
    $region24: #{tpu_custom_call.1} parent=1 // pred_region
      _
    $region25: #{tpu_custom_call.1} parent=1 // pred_fallthru
      _
    // Predicated region
    $region26: #{tpu_custom_call.1} parent=1 // pred_check
      _
    $region27: #{tpu_custom_call.1} parent=1 // pred_check_branch
      %26 = sbr.rel (0) target = $region29
    $region28: #{tpu_custom_call.1} parent=1 // pred_region
      _
    $region29: #{tpu_custom_call.1} parent=1 // pred_fallthru
      _
    %v27 = vld [vmem:[%s0] sm:$0xf]
    %v28 = vld [vmem:[%s0 + $0x4] sm:$0xf]
    %30 = vrot.lane.b32.xlu0 %v28, 16
    %v31 = vpop.permute.xlu0 %30
    %vm33 = vcmask 130048
    %v34 = vsel %vm33, %v27, %v31
    %v35 = vld [vmem:[%s1] sm:$0xff]
    %v36 = vld [vmem:[%s2] sm:$0xff]
    %38 = vrot.lane.b32.xlu0 %v34, 4
    %v39 = vpop.permute.xlu0 %38
    %vm41 = vcmask 31744
    %v42 = vsel %vm41, 0.0, %v39
    %43 = vrot.lane.b32.xlu0 %v34, 116
    %v44 = vpop.permute.xlu0 %43
    %v46 = vsel %vm41, 0.0, %v44
    %48 = vrot.lane.b32.xlu0 %v46, 16
    %v49 = vpop.permute.xlu0 %48
    %v51 = vsel %vm33, %v42, %v49
    %52 = vrot.lane.b32.xlu0 %v34, 2
    %v53 = vpop.permute.xlu0 %52
    %vm55 = vcmask 15360
    %v56 = vsel %vm55, 0.0, %v53
    %57 = vrot.lane.b32.xlu0 %v34, 114
    %v58 = vpop.permute.xlu0 %57
    %v60 = vsel %vm55, 0.0, %v58
    %62 = vrot.lane.b32.xlu0 %v60, 16
    %v63 = vpop.permute.xlu0 %62
    %v65 = vsel %vm33, %v56, %v63
    %v67 = vrot.slane %v65, 4
    %vm69 = vcmask 1043456
    %v70 = vsel %vm69, %v51, %v67
    %72 = vset.pattern.permute.xlu0 0
    %73 = vperm.xlu0 %72, %v36
    %v74 = vpop.permute.xlu0 %73
    %vm76 = vcmask 97280
    %v78 = vsel %vm76, %v35, 0
    %v80 = vsel %vm69, %v34, 0
    %82 = vmatprep.subr.mxu0 0.0
    %83 = vmatpush1.msra.mxu0 %v70
    %84 = vmatprep.subr.mxu0 0.0
    %85 = vmatpush1.msra.mxu0 %v80
    %86 = vmatprep.subr.mxu0 0.0
    %87 = vmatpush1.msra.mxu0 0.0
    %88 = vmatprep.subr.mxu0 0.0
    %89 = vmatpush1.msra.mxu0 0.0
    %90 = vmatprep.subr.mxu0 0.0
    %91 = vmatpush1.msra.mxu0 0.0
    %92 = vmatprep.subr.mxu0 0.0
    %93 = vmatpush1.msra.mxu0 0.0
    %94 = vmatprep.subr.mxu0 0.0
    %95 = vmatpush1.msra.mxu0 0.0
    %96 = vmatprep.subr.mxu0 0.0
    %97 = vmatpush1.msra.mxu0 0.0
    %98 = vmatprep.subr.mxu0 0.0
    %99 = vmatpush1.msra.mxu0 0.0
    %100 = vmatprep.subr.mxu0 0.0
    %101 = vmatpush1.msra.mxu0 0.0
    %102 = vmatprep.subr.mxu0 0.0
    %103 = vmatpush1.msra.mxu0 0.0
    %104 = vmatprep.subr.mxu0 0.0
    %105 = vmatpush1.msra.mxu0 0.0
    %106 = vmatprep.subr.mxu0 0.0
    %107 = vmatpush1.msra.mxu0 0.0
    %108 = vmatprep.subr.mxu0 0.0
    %109 = vmatpush1.msra.mxu0 0.0
    %110 = vmatprep.subr.mxu0 0.0
    %111 = vmatpush1.msra.mxu0 0.0
    %112 = vmatprep.subr.mxu0 0.0
    %113 = vmatpush1.msra.mxu0 0.0
    %114 = vmatprep.subr.mxu0 0.0
    %115 = vmatpush1.msra.mxu0 0.0
    %116 = vmatprep.subr.mxu0 0.0
    %117 = vmatpush1.msra.mxu0 0.0
    %118 = vmatprep.subr.mxu0 0.0
    %119 = vmatpush1.msra.mxu0 0.0
    %120 = vmatprep.subr.mxu0 0.0
    %121 = vmatpush1.msra.mxu0 0.0
    %122 = vmatprep.subr.mxu0 0.0
    %123 = vmatpush1.msra.mxu0 0.0
    %124 = vmatprep.subr.mxu0 0.0
    %125 = vmatpush1.msra.mxu0 0.0
    %126 = vmatprep.subr.mxu0 0.0
    %127 = vmatpush1.msra.mxu0 0.0
    %128 = vmatprep.subr.mxu0 0.0
    %129 = vmatpush1.msra.mxu0 0.0
    %130 = vmatprep.subr.mxu0 0.0
    %131 = vmatpush1.msra.mxu0 0.0
    %132 = vmatprep.subr.mxu0 0.0
    %133 = vmatpush1.msra.mxu0 0.0
    %134 = vmatprep.subr.mxu0 0.0
    %135 = vmatpush1.msra.mxu0 0.0
    %136 = vmatprep.subr.mxu0 0.0
    %137 = vmatpush1.msra.mxu0 0.0
    %138 = vmatprep.subr.mxu0 0.0
    %139 = vmatpush1.msra.mxu0 0.0
    %140 = vmatprep.subr.mxu0 0.0
    %141 = vmatpush1.msra.mxu0 0.0
    %142 = vmatprep.subr.mxu0 0.0
    %143 = vmatpush1.msra.mxu0 0.0
    %144 = vmatprep.subr.mxu0 0.0
    %145 = vmatpush1.msra.mxu0 0.0
    %146 = vmatprep.mubr.f32.mxu0 0.0
    %147 = vmatmul.mubr.f32.gmra.mrb[0].mxu0 %v78
    %v148 = vpop.f32.mrb[0].mxu0
    %v149 = vadd.f32 %v74, %v148
    %v150 = vpop.f32.mrb[0].mxu0
    %151 = vdwg.mxu0
    %vm152 = vcmp.ge.f32.partialorder %v149, 0.0
    %v153 = vmul.f32 %v149, 0.01
    %v154 = vsel %vm152, %v149, %v153
    %v155 = vld [vmem:[%s3] sm:$0xff]
    %v156 = vld [vmem:[%s4] sm:$0xff]
    %158 = vrot.lane.b32.xlu0 %v154, 4
    %v159 = vpop.permute.xlu0 %158
    %v161 = vsel %vm41, 0.0, %v159
    %162 = vrot.lane.b32.xlu0 %v154, 116
    %v163 = vpop.permute.xlu0 %162
    %v165 = vsel %vm41, 0.0, %v163
    %167 = vrot.lane.b32.xlu0 %v165, 16
    %v168 = vpop.permute.xlu0 %167
    %v170 = vsel %vm33, %v161, %v168
    %171 = vrot.lane.b32.xlu0 %v154, 2
    %v172 = vpop.permute.xlu0 %171
    %v174 = vsel %vm55, 0.0, %v172
    %175 = vrot.lane.b32.xlu0 %v154, 114
    %v176 = vpop.permute.xlu0 %175
    %v178 = vsel %vm55, 0.0, %v176
    %180 = vrot.lane.b32.xlu0 %v178, 16
    %v181 = vpop.permute.xlu0 %180
    %v183 = vsel %vm33, %v174, %v181
    %185 = vset.pattern.permute.xlu0 0
    %186 = vperm.xlu0 %185, %v156
    %v187 = vpop.permute.xlu0 %186
    %vm189 = vcmask 195584
    %v191 = vsel %vm189, %v155, 0
    %193 = vmatprep.subr.mxu0 0.0
    %194 = vmatpush1.msra.mxu0 %v170
    %195 = vmatprep.subr.mxu0 0.0
    %196 = vmatpush1.msra.mxu0 %v183
    %197 = vmatprep.subr.mxu0 0.0
    %198 = vmatpush1.msra.mxu0 %v154
    %199 = vmatprep.subr.mxu0 0.0
    %200 = vmatpush1.msra.mxu0 0.0
    %201 = vmatprep.subr.mxu0 0.0
    %202 = vmatpush1.msra.mxu0 0.0
    %203 = vmatprep.subr.mxu0 0.0
    %204 = vmatpush1.msra.mxu0 0.0
    %205 = vmatprep.subr.mxu0 0.0
    %206 = vmatpush1.msra.mxu0 0.0
    %207 = vmatprep.subr.mxu0 0.0
    %208 = vmatpush1.msra.mxu0 0.0
    %209 = vmatprep.subr.mxu0 0.0
    %210 = vmatpush1.msra.mxu0 0.0
    %211 = vmatprep.subr.mxu0 0.0
    %212 = vmatpush1.msra.mxu0 0.0
    %213 = vmatprep.subr.mxu0 0.0
    %214 = vmatpush1.msra.mxu0 0.0
    %215 = vmatprep.subr.mxu0 0.0
    %216 = vmatpush1.msra.mxu0 0.0
    %217 = vmatprep.subr.mxu0 0.0
    %218 = vmatpush1.msra.mxu0 0.0
    %219 = vmatprep.subr.mxu0 0.0
    %220 = vmatpush1.msra.mxu0 0.0
    %221 = vmatprep.subr.mxu0 0.0
    %222 = vmatpush1.msra.mxu0 0.0
    %223 = vmatprep.subr.mxu0 0.0
    %224 = vmatpush1.msra.mxu0 0.0
    %225 = vmatprep.subr.mxu0 0.0
    %226 = vmatpush1.msra.mxu0 0.0
    %227 = vmatprep.subr.mxu0 0.0
    %228 = vmatpush1.msra.mxu0 0.0
    %229 = vmatprep.subr.mxu0 0.0
    %230 = vmatpush1.msra.mxu0 0.0
    %231 = vmatprep.subr.mxu0 0.0
    %232 = vmatpush1.msra.mxu0 0.0
    %233 = vmatprep.subr.mxu0 0.0
    %234 = vmatpush1.msra.mxu0 0.0
    %235 = vmatprep.subr.mxu0 0.0
    %236 = vmatpush1.msra.mxu0 0.0
    %237 = vmatprep.subr.mxu0 0.0
    %238 = vmatpush1.msra.mxu0 0.0
    %239 = vmatprep.subr.mxu0 0.0
    %240 = vmatpush1.msra.mxu0 0.0
    %241 = vmatprep.subr.mxu0 0.0
    %242 = vmatpush1.msra.mxu0 0.0
    %243 = vmatprep.subr.mxu0 0.0
    %244 = vmatpush1.msra.mxu0 0.0
    %245 = vmatprep.subr.mxu0 0.0
    %246 = vmatpush1.msra.mxu0 0.0
    %247 = vmatprep.subr.mxu0 0.0
    %248 = vmatpush1.msra.mxu0 0.0
    %249 = vmatprep.subr.mxu0 0.0
    %250 = vmatpush1.msra.mxu0 0.0
    %251 = vmatprep.subr.mxu0 0.0
    %252 = vmatpush1.msra.mxu0 0.0
    %253 = vmatprep.subr.mxu0 0.0
    %254 = vmatpush1.msra.mxu0 0.0
    %255 = vmatprep.subr.mxu0 0.0
    %256 = vmatpush1.msra.mxu0 0.0
    %257 = vmatprep.mubr.f32.mxu0 0.0
    %258 = vmatmul.mubr.f32.gmra.mrb[0].mxu0 %v191
    %v259 = vpop.f32.mrb[0].mxu0
    %v260 = vadd.f32 %v187, %v259
    %v261 = vpop.f32.mrb[0].mxu0
    %262 = vdwg.mxu0
    %vm263 = vcmp.ge.f32.partialorder %v260, 0.0
    %v264 = vmul.f32 %v260, 0.01
    %v265 = vsel %vm263, %v260, %v264
    %v266 = vld [vmem:[%s5] sm:$0xff]
    %v267 = vld [vmem:[%s6] sm:$0xff]
    %269 = vset.pattern.permute.xlu0 0
    %270 = vperm.xlu0 %269, %v267
    %v271 = vpop.permute.xlu0 %270
    %v274 = vsel %vm41, %v266, 0
    %276 = vmatprep.subr.mxu0 0.0
    %277 = vmatpush1.msra.mxu0 %v80
    %278 = vmatprep.subr.mxu0 0.0
    %279 = vmatpush1.msra.mxu0 0.0
    %280 = vmatprep.subr.mxu0 0.0
    %281 = vmatpush1.msra.mxu0 0.0
    %282 = vmatprep.subr.mxu0 0.0
    %283 = vmatpush1.msra.mxu0 0.0
    %284 = vmatprep.subr.mxu0 0.0
    %285 = vmatpush1.msra.mxu0 0.0
    %286 = vmatprep.subr.mxu0 0.0
    %287 = vmatpush1.msra.mxu0 0.0
    %288 = vmatprep.subr.mxu0 0.0
    %289 = vmatpush1.msra.mxu0 0.0
    %290 = vmatprep.subr.mxu0 0.0
    %291 = vmatpush1.msra.mxu0 0.0
    %292 = vmatprep.subr.mxu0 0.0
    %293 = vmatpush1.msra.mxu0 0.0
    %294 = vmatprep.subr.mxu0 0.0
    %295 = vmatpush1.msra.mxu0 0.0
    %296 = vmatprep.subr.mxu0 0.0
    %297 = vmatpush1.msra.mxu0 0.0
    %298 = vmatprep.subr.mxu0 0.0
    %299 = vmatpush1.msra.mxu0 0.0
    %300 = vmatprep.subr.mxu0 0.0
    %301 = vmatpush1.msra.mxu0 0.0
    %302 = vmatprep.subr.mxu0 0.0
    %303 = vmatpush1.msra.mxu0 0.0
    %304 = vmatprep.subr.mxu0 0.0
    %305 = vmatpush1.msra.mxu0 0.0
    %306 = vmatprep.subr.mxu0 0.0
    %307 = vmatpush1.msra.mxu0 0.0
    %308 = vmatprep.subr.mxu0 0.0
    %309 = vmatpush1.msra.mxu0 0.0
    %310 = vmatprep.subr.mxu0 0.0
    %311 = vmatpush1.msra.mxu0 0.0
    %312 = vmatprep.subr.mxu0 0.0
    %313 = vmatpush1.msra.mxu0 0.0
    %314 = vmatprep.subr.mxu0 0.0
    %315 = vmatpush1.msra.mxu0 0.0
    %316 = vmatprep.subr.mxu0 0.0
    %317 = vmatpush1.msra.mxu0 0.0
    %318 = vmatprep.subr.mxu0 0.0
    %319 = vmatpush1.msra.mxu0 0.0
    %320 = vmatprep.subr.mxu0 0.0
    %321 = vmatpush1.msra.mxu0 0.0
    %322 = vmatprep.subr.mxu0 0.0
    %323 = vmatpush1.msra.mxu0 0.0
    %324 = vmatprep.subr.mxu0 0.0
    %325 = vmatpush1.msra.mxu0 0.0
    %326 = vmatprep.subr.mxu0 0.0
    %327 = vmatpush1.msra.mxu0 0.0
    %328 = vmatprep.subr.mxu0 0.0
    %329 = vmatpush1.msra.mxu0 0.0
    %330 = vmatprep.subr.mxu0 0.0
    %331 = vmatpush1.msra.mxu0 0.0
    %332 = vmatprep.subr.mxu0 0.0
    %333 = vmatpush1.msra.mxu0 0.0
    %334 = vmatprep.subr.mxu0 0.0
    %335 = vmatpush1.msra.mxu0 0.0
    %336 = vmatprep.subr.mxu0 0.0
    %337 = vmatpush1.msra.mxu0 0.0
    %338 = vmatprep.subr.mxu0 0.0
    %339 = vmatpush1.msra.mxu0 0.0
    %340 = vmatprep.mubr.f32.mxu0 0.0
    %341 = vmatmul.mubr.f32.gmra.mrb[0].mxu0 %v274
    %v342 = vpop.f32.mrb[0].mxu0
    %v343 = vadd.f32 %v271, %v342
    %v344 = vpop.f32.mrb[0].mxu0
    %345 = vdwg.mxu0
    %v346 = vadd.f32 %v265, %v343
    %347 = vst.msk [vmem:[#allocation2] sm:$0xff] %vm33, %v346
    %349 = vrot.lane.b32.xlu0 %v346, 112
    %v350 = vpop.permute.xlu0 %349
    %s352 = scalar_lea.vmem [#allocation2], 8
    %353 = vst.msk [vmem:[%s352] sm:$0xff] %vm33, %v350
    // Predicated region
    $region30: #{tpu_custom_call.1} parent=1 // pred_check
      _
    $region31: #{tpu_custom_call.1} parent=1 // pred_check_branch
      %355 = sbr.rel (0) target = $region33
    $region32: #{tpu_custom_call.1} parent=1 // pred_region
      %s357 = ssub.s32 256, 256
      %358 = vsyncadd [#allocation3], %s357
      %s359 = sshll.u32 [#allocation2], 4
      %s360 = int_to_ptr.vmem [resolvable:$true] %s359
      %365 = dma.vmem_to_hbm [thread:$0]  %s360, 256, %s7, [#allocation3], 128, 128, 8
    $region33: #{tpu_custom_call.1} parent=1 // pred_fallthru
      _
    // Predicated region
    $region34: #{tpu_custom_call.1} parent=1 // pred_check
      _
    $region35: #{tpu_custom_call.1} parent=1 // pred_check_branch
      %367 = sbr.rel (0) target = $region37
    $region36: #{tpu_custom_call.1} parent=1 // pred_region
      %368 = dma.done [#allocation3], 256
    $region37: #{tpu_custom_call.1} parent=1 // pred_fallthru
      _
    %369 = vsyncpa [#allocation3], 1

</llo_original>
